<compile_context>
chip_gen: v7x
topology: tpu7x:2x2x1
jax: 0.10.0
libtpu: 0.0.40
codegen_flags: <defaults>
</compile_context>

<pallas_src>
import functools

import jax
import jax.numpy as jnp
from jax.experimental import pallas as pl
from jax.experimental.pallas import tpu as pltpu

BN_EPS = 1e-5


def _band_weights(w_oihw, W):
    """Fold the 3 W-direction taps (incl. W zero-padding) of a 3x3 kernel into
    block-banded matrices:
        M[dy, wi*Cin+ci, wo*Cout+co] = weight[co, ci, dy, wi-wo+1]
                                       if 0 <= wi-wo+1 < 3 else 0.
    Conv along W then becomes one lane-dense matmul per dy."""
    Cout, Cin, KH, KW = w_oihw.shape
    w_t = jnp.transpose(w_oihw, (2, 3, 1, 0))             # (dy, kw, ci, co)
    wi = jnp.arange(W)[:, None]
    wo = jnp.arange(W)[None, :]
    kw = wi - wo + 1                                       # (W, W)
    valid = ((kw >= 0) & (kw < KW)).astype(w_t.dtype)
    blocks = w_t[:, jnp.clip(kw, 0, KW - 1), :, :]         # (KH, W, W, Cin, Cout)
    blocks = blocks * valid[None, :, :, None, None]
    m = jnp.transpose(blocks, (0, 1, 3, 2, 4))             # (dy, wi, ci, wo, co)
    return m.reshape(KH, W * Cin, W * Cout)


def _conv_banded(x2d, m_ref):
    """3x3 'same' conv as 3 MXU matmuls.

    x2d:   (N*Hp, W*Cin) activations in padded-row space (pad rows are zero).
    m_ref: (3, W*Cin, W*Cout) bf16 banded weights.
    Row shifts (+/-1) provide the dy taps; W padding lives inside the band.
    Returns f32 (N*Hp, W*Cout)."""
    rows, wc = x2d.shape
    zrow = jnp.zeros((1, wc), x2d.dtype)
    down = jnp.concatenate([zrow, x2d[:rows - 1, :]], axis=0)   # row r -> x[r-1]
    up = jnp.concatenate([x2d[1:, :], zrow], axis=0)            # row r -> x[r+1]
    acc = jnp.dot(down.astype(jnp.bfloat16), m_ref[0],
                  preferred_element_type=jnp.float32)
    acc = acc + jnp.dot(x2d.astype(jnp.bfloat16), m_ref[1],
                        preferred_element_type=jnp.float32)
    acc = acc + jnp.dot(up.astype(jnp.bfloat16), m_ref[2],
                        preferred_element_type=jnp.float32)
    return acc


def _bn_scale_shift(y_masked, proj, g_cols, b_cols, inv_cnt):
    """Training-mode BatchNorm2d folded to per-column scale/shift.

    y_masked: (N*Hp, W*C) conv output with pad rows zeroed (so they add 0).
    proj:     (W*C, W*C) 0/1 matrix summing over W positions of the same
              channel and broadcasting back to column space (single MXU dot).
    Returns (scale_cols, shift_cols), each (1, W*C) f32."""
    colsum = jnp.sum(y_masked, axis=0, keepdims=True)              # (1, W*C)
    colsq = jnp.sum(y_masked * y_masked, axis=0, keepdims=True)    # (1, W*C)
    mean = jnp.dot(colsum, proj, preferred_element_type=jnp.float32) * inv_cnt
    ex2 = jnp.dot(colsq, proj, preferred_element_type=jnp.float32) * inv_cnt
    var = ex2 - mean * mean                                        # biased var
    scale = g_cols * jax.lax.rsqrt(var + BN_EPS)                   # EUP rsqrt
    shift = b_cols - mean * scale
    return scale, shift


def _basic_block_kernel(x_ref, m1_ref, m2_ref, proj_ref, mask_ref,
                        g1_ref, b1_ref, g2_ref, b2_ref, out_ref, *, inv_cnt):
    x_f32 = x_ref[...]              # (N*Hp, W*C) f32; also the residual path
    mask = mask_ref[...]            # (N*Hp, 1): 1 on real rows, 0 on pad rows
    proj = proj_ref[...]

    # conv1 -> bn1 -> relu
    y1 = _conv_banded(x_f32, m1_ref)
    y1m = y1 * mask                                    # exclude pad rows from stats
    s1, t1 = _bn_scale_shift(y1m, proj, g1_ref[...], b1_ref[...], inv_cnt)
    z = jnp.maximum(y1 * s1 + t1, 0.0) * mask          # re-zero pad rows for conv2

    # conv2 -> bn2
    y2 = _conv_banded(z, m2_ref)
    y2m = y2 * mask
    s2, t2 = _bn_scale_shift(y2m, proj, g2_ref[...], b2_ref[...], inv_cnt)

    # residual add (downsample=None -> identity is the input) + relu.
    # Pad rows hold don't-care values and are dropped by the wrapper.
    out_ref[...] = jnp.maximum(y2 * s2 + t2 + x_f32, 0.0)


def basic_block_forward(x_nchw, w1_oihw, g1, b1, w2_oihw, g2, b2):
    """NCHW in / NCHW out, matching the PyTorch BasicBlock forward."""
    N, Cin, H, W = x_nchw.shape
    Cout = w1_oihw.shape[0]
    assert Cin == Cout, "downsample=None requires inplanes == planes"
    C = Cin
    Hp = H + 2
    WC = W * C
    NHp = N * Hp

    # NCHW -> rows = (n, padded_h), cols = (w*C + c); pad rows are zero.
    x_rows = jnp.transpose(x_nchw, (0, 2, 3, 1)).reshape(N, H, WC)
    x_rows = jnp.pad(x_rows.astype(jnp.float32),
                     ((0, 0), (1, 1), (0, 0))).reshape(NHp, WC)

    # Banded conv weights (bf16 matmul operands, f32 accumulation in-kernel).
    m1 = _band_weights(w1_oihw.astype(jnp.float32), W).astype(jnp.bfloat16)
    m2 = _band_weights(w2_oihw.astype(jnp.float32), W).astype(jnp.bfloat16)

    # Per-channel reduce+broadcast projector and real-row mask.
    proj = jnp.kron(jnp.ones((W, W), jnp.float32), jnp.eye(C, dtype=jnp.float32))
    mask = jnp.pad(jnp.ones((N, H), jnp.float32), ((0, 0), (1, 1))).reshape(NHp, 1)

    # BN affine params tiled into column space (col = w*C + c).
    g1c = jnp.tile(g1.astype(jnp.float32), W).reshape(1, WC)
    b1c = jnp.tile(b1.astype(jnp.float32), W).reshape(1, WC)
    g2c = jnp.tile(g2.astype(jnp.float32), W).reshape(1, WC)
    b2c = jnp.tile(b2.astype(jnp.float32), W).reshape(1, WC)

    kernel = functools.partial(_basic_block_kernel, inv_cnt=1.0 / float(N * H * W))

    out2d = pl.pallas_call(
        kernel,
        out_shape=jax.ShapeDtypeStruct((NHp, WC), jnp.float32),
        in_specs=[pl.BlockSpec(memory_space=pltpu.MemorySpace.VMEM)] * 9,
        out_specs=pl.BlockSpec(memory_space=pltpu.MemorySpace.VMEM),
    )(x_rows, m1, m2, proj, mask, g1c, b1c, g2c, b2c)

    # Drop the halo rows, restore NCHW.
    out = out2d.reshape(N, Hp, W, C)[:, 1:H + 1]
    return jnp.transpose(out, (0, 3, 1, 2))


if __name__ == "__main__":
    # BasicBlock(inplanes=4, planes=4, stride=1, downsample=None)
    N, C, H, W = 2, 4, 16, 16

    key = jax.random.PRNGKey(0)
    kx, kw1, kw2, kg1, kb1, kg2, kb2 = jax.random.split(key, 7)

    x = jax.random.normal(kx, (N, C, H, W), dtype=jnp.float32)

    # conv weights (OIHW, no bias), roughly kaiming-scaled; deterministic.
    fan_in = C * 3 * 3
    w1 = jax.random.normal(kw1, (C, C, 3, 3), dtype=jnp.float32) * (2.0 / fan_in) ** 0.5
    w2 = jax.random.normal(kw2, (C, C, 3, 3), dtype=jnp.float32) * (2.0 / fan_in) ** 0.5

    # BatchNorm affine params (perturbed around PyTorch init gamma=1, beta=0).
    g1 = 1.0 + 0.1 * jax.random.normal(kg1, (C,), dtype=jnp.float32)
    b1 = 0.1 * jax.random.normal(kb1, (C,), dtype=jnp.float32)
    g2 = 1.0 + 0.1 * jax.random.normal(kg2, (C,), dtype=jnp.float32)
    b2 = 0.1 * jax.random.normal(kb2, (C,), dtype=jnp.float32)

    out = basic_block_forward(x, w1, g1, b1, w2, g2, b2)
    out = jax.block_until_ready(out)
    assert out.shape == (N, C, H, W)
    assert bool(jnp.all(jnp.isfinite(out)))

    print("KERNEL_OK")
</pallas_src>

<mosaic_0001>
module attributes {stable_mosaic.version = 11 : i64} {
  func.func @_basic_block_kernel(%arg0: memref<36x64xf32, #tpu.memory_space<vmem>>, %arg1: memref<3x64x64xbf16, #tpu.memory_space<vmem>>, %arg2: memref<3x64x64xbf16, #tpu.memory_space<vmem>>, %arg3: memref<64x64xf32, #tpu.memory_space<vmem>>, %arg4: memref<36x1xf32, #tpu.memory_space<vmem>>, %arg5: memref<1x64xf32, #tpu.memory_space<vmem>>, %arg6: memref<1x64xf32, #tpu.memory_space<vmem>>, %arg7: memref<1x64xf32, #tpu.memory_space<vmem>>, %arg8: memref<1x64xf32, #tpu.memory_space<vmem>>, %arg9: memref<36x64xf32, #tpu.memory_space<vmem>>) attributes {dimension_semantics = [], scalar_prefetch = 0 : i64, scratch_operands = 0 : i64, tpu.core_type = #tpu.core_type<tc>} {
    %c0 = arith.constant 0 : index
    %c0_0 = arith.constant 0 : index
    %0 = vector.load %arg0[%c0, %c0_0] : memref<36x64xf32, #tpu.memory_space<vmem>>, vector<36x64xf32>
    %c0_1 = arith.constant 0 : index
    %c0_2 = arith.constant 0 : index
    %1 = vector.load %arg4[%c0_1, %c0_2] : memref<36x1xf32, #tpu.memory_space<vmem>>, vector<36x1xf32>
    %c0_3 = arith.constant 0 : index
    %c0_4 = arith.constant 0 : index
    %2 = vector.load %arg3[%c0_3, %c0_4] : memref<64x64xf32, #tpu.memory_space<vmem>>, vector<64x64xf32>
    %cst = arith.constant 0.000000e+00 : f32
    %3 = vector.broadcast %cst : f32 to vector<1x64xf32>
    %4 = vector.extract_strided_slice %0 {offsets = [0, 0], sizes = [35, 64], strides = [1, 1]} : vector<36x64xf32> to vector<35x64xf32>
    %5 = tpu.concatenate %3, %4 in 0 : vector<1x64xf32>, vector<35x64xf32> -> vector<36x64xf32>
    %6 = vector.extract_strided_slice %0 {offsets = [1, 0], sizes = [35, 64], strides = [1, 1]} : vector<36x64xf32> to vector<35x64xf32>
    %7 = tpu.concatenate %6, %3 in 0 : vector<35x64xf32>, vector<1x64xf32> -> vector<36x64xf32>
    %8 = arith.truncf %5 : vector<36x64xf32> to vector<36x64xbf16>
    %c0_5 = arith.constant 0 : index
    %c0_6 = arith.constant 0 : index
    %c0_7 = arith.constant 0 : index
    %9 = vector.load %arg1[%c0_5, %c0_6, %c0_7] : memref<3x64x64xbf16, #tpu.memory_space<vmem>>, vector<1x64x64xbf16>
    %10 = vector.shape_cast %9 : vector<1x64x64xbf16> to vector<64x64xbf16>
    %cst_8 = arith.constant dense<0.000000e+00> : vector<36x64xf32>
    %11 = tpu.matmul %8, %10, %cst_8 {dimension_numbers = #tpu.dot_dimension_numbers<[1], [0], [0], [1], [0, 0, 1, 1], [], []>} : vector<36x64xbf16>, vector<64x64xbf16>, vector<36x64xf32> -> vector<36x64xf32>
    %12 = arith.truncf %0 : vector<36x64xf32> to vector<36x64xbf16>
    %c1 = arith.constant 1 : index
    %c0_9 = arith.constant 0 : index
    %c0_10 = arith.constant 0 : index
    %13 = vector.load %arg1[%c1, %c0_9, %c0_10] : memref<3x64x64xbf16, #tpu.memory_space<vmem>>, vector<1x64x64xbf16>
    %14 = vector.shape_cast %13 : vector<1x64x64xbf16> to vector<64x64xbf16>
    %cst_11 = arith.constant dense<0.000000e+00> : vector<36x64xf32>
    %15 = tpu.matmul %12, %14, %cst_11 {dimension_numbers = #tpu.dot_dimension_numbers<[1], [0], [0], [1], [0, 0, 1, 1], [], []>} : vector<36x64xbf16>, vector<64x64xbf16>, vector<36x64xf32> -> vector<36x64xf32>
    %16 = arith.addf %11, %15 : vector<36x64xf32>
    %17 = arith.truncf %7 : vector<36x64xf32> to vector<36x64xbf16>
    %c2 = arith.constant 2 : index
    %c0_12 = arith.constant 0 : index
    %c0_13 = arith.constant 0 : index
    %18 = vector.load %arg1[%c2, %c0_12, %c0_13] : memref<3x64x64xbf16, #tpu.memory_space<vmem>>, vector<1x64x64xbf16>
    %19 = vector.shape_cast %18 : vector<1x64x64xbf16> to vector<64x64xbf16>
    %cst_14 = arith.constant dense<0.000000e+00> : vector<36x64xf32>
    %20 = tpu.matmul %17, %19, %cst_14 {dimension_numbers = #tpu.dot_dimension_numbers<[1], [0], [0], [1], [0, 0, 1, 1], [], []>} : vector<36x64xbf16>, vector<64x64xbf16>, vector<36x64xf32> -> vector<36x64xf32>
    %21 = arith.addf %16, %20 : vector<36x64xf32>
    %22 = vector.broadcast %1 : vector<36x1xf32> to vector<36x64xf32>
    %23 = arith.mulf %21, %22 : vector<36x64xf32>
    %c0_15 = arith.constant 0 : index
    %c0_16 = arith.constant 0 : index
    %24 = vector.load %arg5[%c0_15, %c0_16] : memref<1x64xf32, #tpu.memory_space<vmem>>, vector<1x64xf32>
    %c0_17 = arith.constant 0 : index
    %c0_18 = arith.constant 0 : index
    %25 = vector.load %arg6[%c0_17, %c0_18] : memref<1x64xf32, #tpu.memory_space<vmem>>, vector<1x64xf32>
    %cst_19 = arith.constant dense<0.000000e+00> : vector<64xf32>
    %26 = vector.multi_reduction <add>, %23, %cst_19 [0] : vector<36x64xf32> to vector<64xf32>
    %27 = vector.shape_cast %26 : vector<64xf32> to vector<1x64xf32>
    %28 = arith.mulf %23, %23 : vector<36x64xf32>
    %cst_20 = arith.constant dense<0.000000e+00> : vector<64xf32>
    %29 = vector.multi_reduction <add>, %28, %cst_20 [0] : vector<36x64xf32> to vector<64xf32>
    %30 = vector.shape_cast %29 : vector<64xf32> to vector<1x64xf32>
    %cst_21 = arith.constant dense<0.000000e+00> : vector<1x64xf32>
    %31 = tpu.matmul %27, %2, %cst_21 {dimension_numbers = #tpu.dot_dimension_numbers<[1], [0], [0], [1], [0, 0, 1, 1], [], []>} : vector<1x64xf32>, vector<64x64xf32>, vector<1x64xf32> -> vector<1x64xf32>
    %cst_22 = arith.constant 0.001953125 : f32
    %32 = vector.broadcast %cst_22 : f32 to vector<1x64xf32>
    %33 = arith.mulf %31, %32 : vector<1x64xf32>
    %cst_23 = arith.constant dense<0.000000e+00> : vector<1x64xf32>
    %34 = tpu.matmul %30, %2, %cst_23 {dimension_numbers = #tpu.dot_dimension_numbers<[1], [0], [0], [1], [0, 0, 1, 1], [], []>} : vector<1x64xf32>, vector<64x64xf32>, vector<1x64xf32> -> vector<1x64xf32>
    %cst_24 = arith.constant 0.001953125 : f32
    %35 = vector.broadcast %cst_24 : f32 to vector<1x64xf32>
    %36 = arith.mulf %34, %35 : vector<1x64xf32>
    %37 = arith.mulf %33, %33 : vector<1x64xf32>
    %38 = arith.subf %36, %37 : vector<1x64xf32>
    %cst_25 = arith.constant 9.99999974E-6 : f32
    %39 = vector.broadcast %cst_25 : f32 to vector<1x64xf32>
    %40 = arith.addf %38, %39 : vector<1x64xf32>
    %41 = math.rsqrt %40 : vector<1x64xf32>
    %42 = arith.mulf %24, %41 : vector<1x64xf32>
    %43 = arith.mulf %33, %42 : vector<1x64xf32>
    %44 = arith.subf %25, %43 : vector<1x64xf32>
    %45 = vector.broadcast %42 : vector<1x64xf32> to vector<36x64xf32>
    %46 = arith.mulf %21, %45 : vector<36x64xf32>
    %47 = vector.broadcast %44 : vector<1x64xf32> to vector<36x64xf32>
    %48 = arith.addf %46, %47 : vector<36x64xf32>
    %cst_26 = arith.constant 0.000000e+00 : f32
    %49 = vector.broadcast %cst_26 : f32 to vector<36x64xf32>
    %50 = arith.maximumf %48, %49 : vector<36x64xf32>
    %51 = vector.broadcast %1 : vector<36x1xf32> to vector<36x64xf32>
    %52 = arith.mulf %50, %51 : vector<36x64xf32>
    %cst_27 = arith.constant 0.000000e+00 : f32
    %53 = vector.broadcast %cst_27 : f32 to vector<1x64xf32>
    %54 = vector.extract_strided_slice %52 {offsets = [0, 0], sizes = [35, 64], strides = [1, 1]} : vector<36x64xf32> to vector<35x64xf32>
    %55 = tpu.concatenate %53, %54 in 0 : vector<1x64xf32>, vector<35x64xf32> -> vector<36x64xf32>
    %56 = vector.extract_strided_slice %52 {offsets = [1, 0], sizes = [35, 64], strides = [1, 1]} : vector<36x64xf32> to vector<35x64xf32>
    %57 = tpu.concatenate %56, %53 in 0 : vector<35x64xf32>, vector<1x64xf32> -> vector<36x64xf32>
    %58 = arith.truncf %55 : vector<36x64xf32> to vector<36x64xbf16>
    %c0_28 = arith.constant 0 : index
    %c0_29 = arith.constant 0 : index
    %c0_30 = arith.constant 0 : index
    %59 = vector.load %arg2[%c0_28, %c0_29, %c0_30] : memref<3x64x64xbf16, #tpu.memory_space<vmem>>, vector<1x64x64xbf16>
    %60 = vector.shape_cast %59 : vector<1x64x64xbf16> to vector<64x64xbf16>
    %cst_31 = arith.constant dense<0.000000e+00> : vector<36x64xf32>
    %61 = tpu.matmul %58, %60, %cst_31 {dimension_numbers = #tpu.dot_dimension_numbers<[1], [0], [0], [1], [0, 0, 1, 1], [], []>} : vector<36x64xbf16>, vector<64x64xbf16>, vector<36x64xf32> -> vector<36x64xf32>
    %62 = arith.truncf %52 : vector<36x64xf32> to vector<36x64xbf16>
    %c1_32 = arith.constant 1 : index
    %c0_33 = arith.constant 0 : index
    %c0_34 = arith.constant 0 : index
    %63 = vector.load %arg2[%c1_32, %c0_33, %c0_34] : memref<3x64x64xbf16, #tpu.memory_space<vmem>>, vector<1x64x64xbf16>
    %64 = vector.shape_cast %63 : vector<1x64x64xbf16> to vector<64x64xbf16>
    %cst_35 = arith.constant dense<0.000000e+00> : vector<36x64xf32>
    %65 = tpu.matmul %62, %64, %cst_35 {dimension_numbers = #tpu.dot_dimension_numbers<[1], [0], [0], [1], [0, 0, 1, 1], [], []>} : vector<36x64xbf16>, vector<64x64xbf16>, vector<36x64xf32> -> vector<36x64xf32>
    %66 = arith.addf %61, %65 : vector<36x64xf32>
    %67 = arith.truncf %57 : vector<36x64xf32> to vector<36x64xbf16>
    %c2_36 = arith.constant 2 : index
    %c0_37 = arith.constant 0 : index
    %c0_38 = arith.constant 0 : index
    %68 = vector.load %arg2[%c2_36, %c0_37, %c0_38] : memref<3x64x64xbf16, #tpu.memory_space<vmem>>, vector<1x64x64xbf16>
    %69 = vector.shape_cast %68 : vector<1x64x64xbf16> to vector<64x64xbf16>
    %cst_39 = arith.constant dense<0.000000e+00> : vector<36x64xf32>
    %70 = tpu.matmul %67, %69, %cst_39 {dimension_numbers = #tpu.dot_dimension_numbers<[1], [0], [0], [1], [0, 0, 1, 1], [], []>} : vector<36x64xbf16>, vector<64x64xbf16>, vector<36x64xf32> -> vector<36x64xf32>
    %71 = arith.addf %66, %70 : vector<36x64xf32>
    %72 = vector.broadcast %1 : vector<36x1xf32> to vector<36x64xf32>
    %73 = arith.mulf %71, %72 : vector<36x64xf32>
    %c0_40 = arith.constant 0 : index
    %c0_41 = arith.constant 0 : index
    %74 = vector.load %arg7[%c0_40, %c0_41] : memref<1x64xf32, #tpu.memory_space<vmem>>, vector<1x64xf32>
    %c0_42 = arith.constant 0 : index
    %c0_43 = arith.constant 0 : index
    %75 = vector.load %arg8[%c0_42, %c0_43] : memref<1x64xf32, #tpu.memory_space<vmem>>, vector<1x64xf32>
    %cst_44 = arith.constant dense<0.000000e+00> : vector<64xf32>
    %76 = vector.multi_reduction <add>, %73, %cst_44 [0] : vector<36x64xf32> to vector<64xf32>
    %77 = vector.shape_cast %76 : vector<64xf32> to vector<1x64xf32>
    %78 = arith.mulf %73, %73 : vector<36x64xf32>
    %cst_45 = arith.constant dense<0.000000e+00> : vector<64xf32>
    %79 = vector.multi_reduction <add>, %78, %cst_45 [0] : vector<36x64xf32> to vector<64xf32>
    %80 = vector.shape_cast %79 : vector<64xf32> to vector<1x64xf32>
    %cst_46 = arith.constant dense<0.000000e+00> : vector<1x64xf32>
    %81 = tpu.matmul %77, %2, %cst_46 {dimension_numbers = #tpu.dot_dimension_numbers<[1], [0], [0], [1], [0, 0, 1, 1], [], []>} : vector<1x64xf32>, vector<64x64xf32>, vector<1x64xf32> -> vector<1x64xf32>
    %cst_47 = arith.constant 0.001953125 : f32
    %82 = vector.broadcast %cst_47 : f32 to vector<1x64xf32>
    %83 = arith.mulf %81, %82 : vector<1x64xf32>
    %cst_48 = arith.constant dense<0.000000e+00> : vector<1x64xf32>
    %84 = tpu.matmul %80, %2, %cst_48 {dimension_numbers = #tpu.dot_dimension_numbers<[1], [0], [0], [1], [0, 0, 1, 1], [], []>} : vector<1x64xf32>, vector<64x64xf32>, vector<1x64xf32> -> vector<1x64xf32>
    %cst_49 = arith.constant 0.001953125 : f32
    %85 = vector.broadcast %cst_49 : f32 to vector<1x64xf32>
    %86 = arith.mulf %84, %85 : vector<1x64xf32>
    %87 = arith.mulf %83, %83 : vector<1x64xf32>
    %88 = arith.subf %86, %87 : vector<1x64xf32>
    %cst_50 = arith.constant 9.99999974E-6 : f32
    %89 = vector.broadcast %cst_50 : f32 to vector<1x64xf32>
    %90 = arith.addf %88, %89 : vector<1x64xf32>
    %91 = math.rsqrt %90 : vector<1x64xf32>
    %92 = arith.mulf %74, %91 : vector<1x64xf32>
    %93 = arith.mulf %83, %92 : vector<1x64xf32>
    %94 = arith.subf %75, %93 : vector<1x64xf32>
    %95 = vector.broadcast %92 : vector<1x64xf32> to vector<36x64xf32>
    %96 = arith.mulf %71, %95 : vector<36x64xf32>
    %97 = vector.broadcast %94 : vector<1x64xf32> to vector<36x64xf32>
    %98 = arith.addf %96, %97 : vector<36x64xf32>
    %99 = arith.addf %98, %0 : vector<36x64xf32>
    %cst_51 = arith.constant 0.000000e+00 : f32
    %100 = vector.broadcast %cst_51 : f32 to vector<36x64xf32>
    %101 = arith.maximumf %99, %100 : vector<36x64xf32>
    %c0_52 = arith.constant 0 : index
    %c0_53 = arith.constant 0 : index
    %102 = vector.load %arg9[%c0_52, %c0_53] : memref<36x64xf32, #tpu.memory_space<vmem>>, vector<36x64xf32>
    tpu.vector_store %arg9[%c0_52, %c0_53], %101 {strides = array<i32>} : memref<36x64xf32, #tpu.memory_space<vmem>>, vector<36x64xf32>,
    return
  }
}

</mosaic_0001>

<llo_original>
// kernel: tpu_custom_call.1
$region0: #{tpu_custom_call.1}
  #allocation0 [shape = 'u32[]', space=smem, size = 0x4, offset = 0x4, fixed_abs, tag = 'smem constant byte address 0x4 - core index']
  #allocation1 [shape = 'u32[144,128]{1,0:T(1,128)}', space=vmem, size = 0x12000, scoped, tag = 'internal scratch']
  %s0 = inlined_call_operand.vmem [shape: f32[36,64], index: 0, kind: input, shape index: {}]
  %s1 = inlined_call_operand.hbm [shape: bf16[3,64,64], index: 1, kind: input, shape index: {}]
  %s2 = inlined_call_operand.hbm [shape: bf16[3,64,64], index: 2, kind: input, shape index: {}]
  %s3 = inlined_call_operand.hbm [shape: f32[64,64], index: 3, kind: input, shape index: {}]
  %s4 = inlined_call_operand.vmem [shape: f32[36,1], index: 4, kind: input, shape index: {}]
  %s5 = inlined_call_operand.vmem [shape: f32[1,64], index: 5, kind: input, shape index: {}]
  %s6 = inlined_call_operand.vmem [shape: f32[1,64], index: 6, kind: input, shape index: {}]
  %s7 = inlined_call_operand.vmem [shape: f32[1,64], index: 7, kind: input, shape index: {}]
  %s8 = inlined_call_operand.vmem [shape: f32[1,64], index: 8, kind: input, shape index: {}]
  %s9 = inlined_call_operand.hbm [shape: f32[36,64], index: 9, kind: output, shape index: {}]
  %s10 = sld [smem:[#allocation0]]
  $region58: #{tpu_custom_call.1} parent=0
    _
  %s12 = ssub.s32 1, %s10
  %s13 = scalar_select 0, %s12, %s10
  $region1: #{tpu_custom_call.1} parent=0
    #allocation2 [shape = 'u8[49152]{0}', space=vmem, size = 0xc000, scoped, tag = 'input window, operand 1, single buffered']
    #allocation3 [shape = 's32[1]{0}', space=sflag, size = 0x4, scoped, tag = 'scoped memory for tpu_custom_call.1']
    #allocation4 [shape = 's32[1]{0}', space=sflag, size = 0x4, scoped, tag = 'scoped memory for tpu_custom_call.1']
    #allocation5 [shape = 'u8[49152]{0}', space=vmem, size = 0xc000, scoped, tag = 'input window, operand 2, single buffered']
    #allocation6 [shape = 's32[1]{0}', space=sflag, size = 0x4, scoped, tag = 'scoped memory for tpu_custom_call.1']
    #allocation7 [shape = 'u8[32768]{0}', space=vmem, size = 0x8000, scoped, tag = 'input window, operand 3, single buffered']
    #allocation8 [shape = 'u8[20480]{0}', space=vmem, size = 0x5000, scoped, tag = 'output window, operand 0, single buffered']
    %14 = vsyncpa [#allocation3], 0
    %15 = vsyncpa [#allocation6], 0
    %16 = vsyncpa [#allocation4], 0
    // Predicated region
    $region2: #{tpu_custom_call.1} parent=1 // pred_check
      _
    $region3: #{tpu_custom_call.1} parent=1 // pred_check_branch
      %18 = sbr.rel (0) target = $region5
    $region4: #{tpu_custom_call.1} parent=1 // pred_region
      _
    $region5: #{tpu_custom_call.1} parent=1 // pred_fallthru
      _
    // Predicated region
    $region6: #{tpu_custom_call.1} parent=1 // pred_check
      _
    $region7: #{tpu_custom_call.1} parent=1 // pred_check_branch
      %20 = sbr.rel (0) target = $region9
    $region8: #{tpu_custom_call.1} parent=1 // pred_region
      %s22 = ssub.s32 1536, 1536
      %23 = vsyncadd [#allocation3], %s22
      %s24 = sshll.u32 [#allocation2], 4
      %s25 = int_to_ptr.vmem [resolvable:$true] %s24
      %30 = dma.hbm_to_vmem [thread:$0]  %s1, 1536, %s25, [#allocation3], 64, 64, 4
    $region9: #{tpu_custom_call.1} parent=1 // pred_fallthru
      _
    // Predicated region
    $region10: #{tpu_custom_call.1} parent=1 // pred_check
      _
    $region11: #{tpu_custom_call.1} parent=1 // pred_check_branch
      %32 = sbr.rel (0) target = $region13
    $region12: #{tpu_custom_call.1} parent=1 // pred_region
      %s34 = ssub.s32 1536, 1536
      %35 = vsyncadd [#allocation6], %s34
      %s36 = sshll.u32 [#allocation5], 4
      %s37 = int_to_ptr.vmem [resolvable:$true] %s36
      %42 = dma.hbm_to_vmem [thread:$0]  %s2, 1536, %s37, [#allocation6], 64, 64, 4
    $region13: #{tpu_custom_call.1} parent=1 // pred_fallthru
      _
    // Predicated region
    $region14: #{tpu_custom_call.1} parent=1 // pred_check
      _
    $region15: #{tpu_custom_call.1} parent=1 // pred_check_branch
      %44 = sbr.rel (0) target = $region17
    $region16: #{tpu_custom_call.1} parent=1 // pred_region
      %s46 = ssub.s32 1024, 1024
      %47 = vsyncadd [#allocation6], %s46
      %s48 = sshll.u32 [#allocation7], 4
      %s49 = int_to_ptr.vmem [resolvable:$true] %s48
      %54 = dma.hbm_to_vmem [thread:$0]  %s3, 1024, %s49, [#allocation6], 128, 128, 8
    $region17: #{tpu_custom_call.1} parent=1 // pred_fallthru
      _
    // Predicated region
    $region18: #{tpu_custom_call.1} parent=1 // pred_check
      _
    $region19: #{tpu_custom_call.1} parent=1 // pred_check_branch
      %56 = sbr.rel (0) target = $region21
    $region20: #{tpu_custom_call.1} parent=1 // pred_region
      _
    $region21: #{tpu_custom_call.1} parent=1 // pred_fallthru
      _
    // Predicated region
    $region22: #{tpu_custom_call.1} parent=1 // pred_check
      _
    $region23: #{tpu_custom_call.1} parent=1 // pred_check_branch
      %58 = sbr.rel (0) target = $region25
    $region24: #{tpu_custom_call.1} parent=1 // pred_region
      _
    $region25: #{tpu_custom_call.1} parent=1 // pred_fallthru
      _
    // Predicated region
    $region26: #{tpu_custom_call.1} parent=1 // pred_check
      _
    $region27: #{tpu_custom_call.1} parent=1 // pred_check_branch
      %60 = sbr.rel (0) target = $region29
    $region28: #{tpu_custom_call.1} parent=1 // pred_region
      _
    $region29: #{tpu_custom_call.1} parent=1 // pred_fallthru
      _
    // Predicated region
    $region30: #{tpu_custom_call.1} parent=1 // pred_check
      _
    $region31: #{tpu_custom_call.1} parent=1 // pred_check_branch
      %62 = sbr.rel (0) target = $region33
    $region32: #{tpu_custom_call.1} parent=1 // pred_region
      _
    $region33: #{tpu_custom_call.1} parent=1 // pred_fallthru
      _
    // Predicated region
    $region34: #{tpu_custom_call.1} parent=1 // pred_check
      _
    $region35: #{tpu_custom_call.1} parent=1 // pred_check_branch
      %64 = sbr.rel (0) target = $region37
    $region36: #{tpu_custom_call.1} parent=1 // pred_region
      _
    $region37: #{tpu_custom_call.1} parent=1 // pred_fallthru
      _
    // Predicated region
    $region38: #{tpu_custom_call.1} parent=1 // pred_check
      _
    $region39: #{tpu_custom_call.1} parent=1 // pred_check_branch
      %66 = sbr.rel (0) target = $region41
    $region40: #{tpu_custom_call.1} parent=1 // pred_region
      %67 = dma.done [#allocation3], 1536
    $region41: #{tpu_custom_call.1} parent=1 // pred_fallthru
      _
    // Predicated region
    $region42: #{tpu_custom_call.1} parent=1 // pred_check
      _
    $region43: #{tpu_custom_call.1} parent=1 // pred_check_branch
      %69 = sbr.rel (0) target = $region45
    $region44: #{tpu_custom_call.1} parent=1 // pred_region
      %70 = dma.done [#allocation6], 1536
    $region45: #{tpu_custom_call.1} parent=1 // pred_fallthru
      _
    // Predicated region
    $region46: #{tpu_custom_call.1} parent=1 // pred_check
      _
    $region47: #{tpu_custom_call.1} parent=1 // pred_check_branch
      %72 = sbr.rel (0) target = $region49
    $region48: #{tpu_custom_call.1} parent=1 // pred_region
      %73 = dma.done [#allocation6], 1024
    $region49: #{tpu_custom_call.1} parent=1 // pred_fallthru
      _
    %v75 = vld [vmem:[%s0] sm:$0xff]
    %v76 = vld [vmem:[%s0 + $0x8] sm:$0xff]
    %v77 = vld [vmem:[%s0 + $0x10] sm:$0xff]
    %v78 = vld [vmem:[%s0 + $0x18] sm:$0xff]
    %v79 = vld [vmem:[%s0 + $0x20] sm:$0xf]
    %v80 = vld [vmem:[%s4] sm:$0xff]
    %v81 = vld [vmem:[%s4 + $0x8] sm:$0xff]
    %v82 = vld [vmem:[%s4 + $0x10] sm:$0xff]
    %v83 = vld [vmem:[%s4 + $0x18] sm:$0xff]
    %v84 = vld [vmem:[%s4 + $0x20] sm:$0xf]
    %v85 = vld [vmem:[#allocation7] sm:$0xff]
    %v86 = vld [vmem:[#allocation7 + $0x8] sm:$0xff]
    %v87 = vld [vmem:[#allocation7 + $0x10] sm:$0xff]
    %v88 = vld [vmem:[#allocation7 + $0x18] sm:$0xff]
    %v89 = vld [vmem:[#allocation7 + $0x20] sm:$0xff]
    %v90 = vld [vmem:[#allocation7 + $0x28] sm:$0xff]
    %v91 = vld [vmem:[#allocation7 + $0x30] sm:$0xff]
    %v92 = vld [vmem:[#allocation7 + $0x38] sm:$0xff]
    %vm98 = vcmask 1040384
    %v99 = vrot.slane %v75, 7
    %v100 = vrot.slane %v76, 7
    %v101 = vsel %vm98, %v99, %v100
    %v102 = vrot.slane %v77, 7
    %v103 = vsel %vm98, %v100, %v102
    %v104 = vrot.slane %v78, 7
    %v105 = vsel %vm98, %v102, %v104
    %v106 = vrot.slane %v79, 7
    %v107 = vsel %vm98, %v104, %v106
    %v113 = vsel %vm98, 0.0, %v99
    %vm114 = vcmask 1046528
    %v115 = vrot.slane %v75, 1
    %v116 = vrot.slane %v76, 1
    %v117 = vsel %vm114, %v115, %v116
    %v118 = vrot.slane %v77, 1
    %v119 = vsel %vm114, %v116, %v118
    %v120 = vrot.slane %v78, 1
    %v121 = vsel %vm114, %v118, %v120
    %v122 = vrot.slane %v79, 1
    %v123 = vsel %vm114, %v120, %v122
    %vm129 = vcmask 1042432
    %v130 = vsel %vm129, %v122, 0.0
    %v131 = vpack.c.bf16 %v101, %v113
    %v132 = vpack.c.bf16 %v105, %v103
    %v133 = vpack.c.bf16 %v107, %v107
    %v134 = vld [vmem:[#allocation2] sm:$0xf]
    %v135 = vld [vmem:[#allocation2 + $0x4] sm:$0xf]
    %v136 = vld [vmem:[#allocation2 + $0x8] sm:$0xf]
    %v137 = vld [vmem:[#allocation2 + $0xc] sm:$0xf]
    %v138 = vld [vmem:[#allocation2 + $0x10] sm:$0xf]
    %v139 = vld [vmem:[#allocation2 + $0x14] sm:$0xf]
    %v140 = vld [vmem:[#allocation2 + $0x18] sm:$0xf]
    %v141 = vld [vmem:[#allocation2 + $0x1c] sm:$0xf]
    %v142 = vpack.c.bf16 %v76, %v75
    %v143 = vpack.c.bf16 %v78, %v77
    %v144 = vpack.c.bf16 %v79, %v79
    %s145 = scalar_lea.vmem [#allocation2], 32
    %v146 = vld [vmem:[%s145] sm:$0xf]
    %v147 = vld [vmem:[%s145 + $0x4] sm:$0xf]
    %v148 = vld [vmem:[%s145 + $0x8] sm:$0xf]
    %v149 = vld [vmem:[%s145 + $0xc] sm:$0xf]
    %v150 = vld [vmem:[%s145 + $0x10] sm:$0xf]
    %v151 = vld [vmem:[%s145 + $0x14] sm:$0xf]
    %v152 = vld [vmem:[%s145 + $0x18] sm:$0xf]
    %v153 = vld [vmem:[%s145 + $0x1c] sm:$0xf]
    %v162 = vunpack.c.l.b16 %v146
    %v163 = vunpack.c.l.b16 %v147
    %v164 = vunpack.c.l.b16 %v148
    %v165 = vunpack.c.l.b16 %v149
    %v166 = vunpack.c.l.b16 %v150
    %v167 = vunpack.c.l.b16 %v151
    %v168 = vunpack.c.l.b16 %v152
    %v169 = vunpack.c.l.b16 %v153
    %v170 = vpack.c.b16 %v163, %v162
    %v171 = vpack.c.b16 %v165, %v164
    %v172 = vpack.c.b16 %v167, %v166
    %v173 = vpack.c.b16 %v169, %v168
    %vm178 = vcmask 523264
    %v180 = vsel %vm178, %v142, 0
    %v183 = vsel %vm178, %v143, 0
    %v186 = vsel %vm178, %v144, 0
    %188 = vmatprep.subr.bf16.mxu0 0
    %189 = vmatpush1.bf16.msra.mxu0 %v170
    %190 = vmatprep.subr.bf16.mxu0 0
    %191 = vmatpush1.bf16.msra.mxu0 %v171
    %192 = vmatprep.subr.bf16.mxu0 0
    %193 = vmatpush1.bf16.msra.mxu0 %v172
    %194 = vmatprep.subr.bf16.mxu0 0
    %195 = vmatpush1.bf16.msra.mxu0 %v173
    %196 = vmatprep.subr.bf16.mxu0 0
    %197 = vmatpush1.bf16.msra.mxu0 0
    %198 = vmatprep.subr.bf16.mxu0 0
    %199 = vmatpush1.bf16.msra.mxu0 0
    %200 = vmatprep.subr.bf16.mxu0 0
    %201 = vmatpush1.bf16.msra.mxu0 0
    %202 = vmatprep.subr.bf16.mxu0 0
    %203 = vmatpush1.bf16.msra.mxu0 0
    %204 = vmatprep.subr.bf16.mxu0 0
    %205 = vmatpush1.bf16.msra.mxu0 0
    %206 = vmatprep.subr.bf16.mxu0 0
    %207 = vmatpush1.bf16.msra.mxu0 0
    %208 = vmatprep.subr.bf16.mxu0 0
    %209 = vmatpush1.bf16.msra.mxu0 0
    %210 = vmatprep.subr.bf16.mxu0 0
    %211 = vmatpush1.bf16.msra.mxu0 0
    %212 = vmatprep.subr.bf16.mxu0 0
    %213 = vmatpush1.bf16.msra.mxu0 0
    %214 = vmatprep.subr.bf16.mxu0 0
    %215 = vmatpush1.bf16.msra.mxu0 0
    %216 = vmatprep.subr.bf16.mxu0 0
    %217 = vmatpush1.bf16.msra.mxu0 0
    %218 = vmatprep.subr.bf16.mxu0 0
    %219 = vmatpush1.bf16.msra.mxu0 0
    %220 = vmatprep.mubr.bf16.mxu0 0
    %221 = vmatmul.mubr.bf16.gmra.mrb[0].mxu0 %v180
    %v222 = vpop.f32.mrb[0].mxu0
    %v223 = vadd.f32 0.0, %v222
    %v224 = vpop.f32.mrb[0].mxu0
    %v225 = vpop.f32.mrb[0].mxu0
    %v226 = vadd.f32 0.0, %v225
    %v227 = vpop.f32.mrb[0].mxu0
    %228 = vmatprep.mubr.bf16.mxu0 0
    %229 = vmatmul.mubr.bf16.gmra.mrb[0].mxu0 %v183
    %v230 = vpop.f32.mrb[0].mxu0
    %v231 = vadd.f32 0.0, %v230
    %v232 = vpop.f32.mrb[0].mxu0
    %v233 = vpop.f32.mrb[0].mxu0
    %v234 = vadd.f32 0.0, %v233
    %v235 = vpop.f32.mrb[0].mxu0
    %236 = vmatprep.mubr.bf16.mxu0 0
    %237 = vmatmul.mubr.bf16.gmra.mrb[0].mxu0 %v186
    %v238 = vpop.f32.mrb[0].mxu0
    %v239 = vadd.f32 0.0, %v238
    %v240 = vpop.f32.mrb[0].mxu0
    %v241 = vpop.f32.mrb[0].mxu0
    %v242 = vpop.f32.mrb[0].mxu0
    %243 = vdwg.mxu0
    %v252 = vunpack.c.l.b16 %v134
    %v253 = vunpack.c.l.b16 %v135
    %v254 = vunpack.c.l.b16 %v136
    %v255 = vunpack.c.l.b16 %v137
    %v256 = vunpack.c.l.b16 %v138
    %v257 = vunpack.c.l.b16 %v139
    %v258 = vunpack.c.l.b16 %v140
    %v259 = vunpack.c.l.b16 %v141
    %v260 = vpack.c.b16 %v253, %v252
    %v261 = vpack.c.b16 %v255, %v254
    %v262 = vpack.c.b16 %v257, %v256
    %v263 = vpack.c.b16 %v259, %v258
    %v269 = vsel %vm178, %v131, 0
    %v272 = vsel %vm178, %v132, 0
    %v275 = vsel %vm178, %v133, 0
    %277 = vmatprep.subr.bf16.mxu0 0
    %278 = vmatpush1.bf16.msra.mxu0 %v260
    %279 = vmatprep.subr.bf16.mxu0 0
    %280 = vmatpush1.bf16.msra.mxu0 %v261
    %281 = vmatprep.subr.bf16.mxu0 0
    %282 = vmatpush1.bf16.msra.mxu0 %v262
    %283 = vmatprep.subr.bf16.mxu0 0
    %284 = vmatpush1.bf16.msra.mxu0 %v263
    %285 = vmatprep.subr.bf16.mxu0 0
    %286 = vmatpush1.bf16.msra.mxu0 0
    %287 = vmatprep.subr.bf16.mxu0 0
    %288 = vmatpush1.bf16.msra.mxu0 0
    %289 = vmatprep.subr.bf16.mxu0 0
    %290 = vmatpush1.bf16.msra.mxu0 0
    %291 = vmatprep.subr.bf16.mxu0 0
    %292 = vmatpush1.bf16.msra.mxu0 0
    %293 = vmatprep.subr.bf16.mxu0 0
    %294 = vmatpush1.bf16.msra.mxu0 0
    %295 = vmatprep.subr.bf16.mxu0 0
    %296 = vmatpush1.bf16.msra.mxu0 0
    %297 = vmatprep.subr.bf16.mxu0 0
    %298 = vmatpush1.bf16.msra.mxu0 0
    %299 = vmatprep.subr.bf16.mxu0 0
    %300 = vmatpush1.bf16.msra.mxu0 0
    %301 = vmatprep.subr.bf16.mxu0 0
    %302 = vmatpush1.bf16.msra.mxu0 0
    %303 = vmatprep.subr.bf16.mxu0 0
    %304 = vmatpush1.bf16.msra.mxu0 0
    %305 = vmatprep.subr.bf16.mxu0 0
    %306 = vmatpush1.bf16.msra.mxu0 0
    %307 = vmatprep.subr.bf16.mxu0 0
    %308 = vmatpush1.bf16.msra.mxu0 0
    %309 = vmatprep.mubr.bf16.mxu0 0
    %310 = vmatmul.mubr.bf16.gmra.mrb[0].mxu0 %v269
    %v311 = vpop.f32.mrb[0].mxu0
    %v312 = vadd.f32 %v223, %v311
    %v313 = vpop.f32.mrb[0].mxu0
    %v314 = vpop.f32.mrb[0].mxu0
    %v315 = vadd.f32 %v226, %v314
    %v316 = vpop.f32.mrb[0].mxu0
    %317 = vmatprep.mubr.bf16.mxu0 0
    %318 = vmatmul.mubr.bf16.gmra.mrb[0].mxu0 %v272
    %v319 = vpop.f32.mrb[0].mxu0
    %v320 = vadd.f32 %v231, %v319
    %v321 = vpop.f32.mrb[0].mxu0
    %v322 = vpop.f32.mrb[0].mxu0
    %v323 = vadd.f32 %v234, %v322
    %v324 = vpop.f32.mrb[0].mxu0
    %325 = vmatprep.mubr.bf16.mxu0 0
    %326 = vmatmul.mubr.bf16.gmra.mrb[0].mxu0 %v275
    %v327 = vpop.f32.mrb[0].mxu0
    %v328 = vadd.f32 %v239, %v327
    %v329 = vpop.f32.mrb[0].mxu0
    %v330 = vpop.f32.mrb[0].mxu0
    %v331 = vpop.f32.mrb[0].mxu0
    %332 = vdwg.mxu0
    %v333 = vpack.c.bf16 %v119, %v117
    %v334 = vpack.c.bf16 %v123, %v121
    %v335 = vpack.c.bf16 %v130, %v130
    %s336 = scalar_lea.vmem [#allocation2], 64
    %v337 = vld [vmem:[%s336] sm:$0xf]
    %v338 = vld [vmem:[%s336 + $0x4] sm:$0xf]
    %v339 = vld [vmem:[%s336 + $0x8] sm:$0xf]
    %v340 = vld [vmem:[%s336 + $0xc] sm:$0xf]
    %v341 = vld [vmem:[%s336 + $0x10] sm:$0xf]
    %v342 = vld [vmem:[%s336 + $0x14] sm:$0xf]
    %v343 = vld [vmem:[%s336 + $0x18] sm:$0xf]
    %v344 = vld [vmem:[%s336 + $0x1c] sm:$0xf]
    %v353 = vunpack.c.l.b16 %v337
    %v354 = vunpack.c.l.b16 %v338
    %v355 = vunpack.c.l.b16 %v339
    %v356 = vunpack.c.l.b16 %v340
    %v357 = vunpack.c.l.b16 %v341
    %v358 = vunpack.c.l.b16 %v342
    %v359 = vunpack.c.l.b16 %v343
    %v360 = vunpack.c.l.b16 %v344
    %v361 = vpack.c.b16 %v354, %v353
    %v362 = vpack.c.b16 %v356, %v355
    %v363 = vpack.c.b16 %v358, %v357
    %v364 = vpack.c.b16 %v360, %v359
    %v370 = vsel %vm178, %v333, 0
    %v373 = vsel %vm178, %v334, 0
    %v376 = vsel %vm178, %v335, 0
    %378 = vmatprep.subr.bf16.mxu0 0
    %379 = vmatpush1.bf16.msra.mxu0 %v361
    %380 = vmatprep.subr.bf16.mxu0 0
    %381 = vmatpush1.bf16.msra.mxu0 %v362
    %382 = vmatprep.subr.bf16.mxu0 0
    %383 = vmatpush1.bf16.msra.mxu0 %v363
    %384 = vmatprep.subr.bf16.mxu0 0
    %385 = vmatpush1.bf16.msra.mxu0 %v364
    %386 = vmatprep.subr.bf16.mxu0 0
    %387 = vmatpush1.bf16.msra.mxu0 0
    %388 = vmatprep.subr.bf16.mxu0 0
    %389 = vmatpush1.bf16.msra.mxu0 0
    %390 = vmatprep.subr.bf16.mxu0 0
    %391 = vmatpush1.bf16.msra.mxu0 0
    %392 = vmatprep.subr.bf16.mxu0 0
    %393 = vmatpush1.bf16.msra.mxu0 0
    %394 = vmatprep.subr.bf16.mxu0 0
    %395 = vmatpush1.bf16.msra.mxu0 0
    %396 = vmatprep.subr.bf16.mxu0 0
    %397 = vmatpush1.bf16.msra.mxu0 0
    %398 = vmatprep.subr.bf16.mxu0 0
    %399 = vmatpush1.bf16.msra.mxu0 0
    %400 = vmatprep.subr.bf16.mxu0 0
    %401 = vmatpush1.bf16.msra.mxu0 0
    %402 = vmatprep.subr.bf16.mxu0 0
    %403 = vmatpush1.bf16.msra.mxu0 0
    %404 = vmatprep.subr.bf16.mxu0 0
    %405 = vmatpush1.bf16.msra.mxu0 0
    %406 = vmatprep.subr.bf16.mxu0 0
    %407 = vmatpush1.bf16.msra.mxu0 0
    %408 = vmatprep.subr.bf16.mxu0 0
    %409 = vmatpush1.bf16.msra.mxu0 0
    %410 = vmatprep.mubr.bf16.mxu0 0
    %411 = vmatmul.mubr.bf16.gmra.mrb[0].mxu0 %v370
    %v412 = vpop.f32.mrb[0].mxu0
    %v413 = vadd.f32 0.0, %v412
    %v414 = vpop.f32.mrb[0].mxu0
    %v415 = vpop.f32.mrb[0].mxu0
    %v416 = vadd.f32 0.0, %v415
    %v417 = vpop.f32.mrb[0].mxu0
    %418 = vmatprep.mubr.bf16.mxu0 0
    %419 = vmatmul.mubr.bf16.gmra.mrb[0].mxu0 %v373
    %v420 = vpop.f32.mrb[0].mxu0
    %v421 = vadd.f32 0.0, %v420
    %v422 = vpop.f32.mrb[0].mxu0
    %v423 = vpop.f32.mrb[0].mxu0
    %v424 = vadd.f32 0.0, %v423
    %v425 = vpop.f32.mrb[0].mxu0
    %426 = vmatprep.mubr.bf16.mxu0 0
    %427 = vmatmul.mubr.bf16.gmra.mrb[0].mxu0 %v376
    %v428 = vpop.f32.mrb[0].mxu0
    %v429 = vadd.f32 0.0, %v428
    %v430 = vpop.f32.mrb[0].mxu0
    %v431 = vpop.f32.mrb[0].mxu0
    %v432 = vpop.f32.mrb[0].mxu0
    %433 = vdwg.mxu0
    %v434 = vadd.f32 %v312, %v413
    %v435 = vadd.f32 %v315, %v416
    %v436 = vadd.f32 %v320, %v421
    %v437 = vadd.f32 %v323, %v424
    %v438 = vadd.f32 %v328, %v429
    %440 = vset.pattern.permute.xlu0 0
    %441 = vperm.xlu0 %440, %v80
    %v442 = vpop.permute.xlu0 %441
    %445 = vset.pattern.permute.xlu0 0
    %446 = vperm.xlu0 %445, %v81
    %v447 = vpop.permute.xlu0 %446
    %450 = vset.pattern.permute.xlu0 0
    %451 = vperm.xlu0 %450, %v82
    %v452 = vpop.permute.xlu0 %451
    %455 = vset.pattern.permute.xlu0 0
    %456 = vperm.xlu0 %455, %v83
    %v457 = vpop.permute.xlu0 %456
    %460 = vset.pattern.permute.xlu0 0
    %461 = vperm.xlu0 %460, %v84
    %v462 = vpop.permute.xlu0 %461
    %v464 = vmul.f32 %v434, %v442
    %v465 = vmul.f32 %v435, %v447
    %v466 = vmul.f32 %v436, %v452
    %v467 = vmul.f32 %v437, %v457
    %v468 = vmul.f32 %v438, %v462
    %v469 = vld [vmem:[%s5] sm:$0x1]
    %v470 = vld [vmem:[%s6] sm:$0x1]
    %v471 = vsel %vm178, %v464, 0.0
    %v472 = vsel %vm178, %v465, 0.0
    %v473 = vadd.f32 %v471, %v472
    %v474 = vsel %vm178, %v466, 0.0
    %v475 = vadd.f32 %v473, %v474
    %v476 = vsel %vm178, %v467, 0.0
    %v477 = vadd.f32 %v475, %v476
    %vm478 = vcmask 519168
    %v479 = vsel %vm478, %v468, 0.0
    %v480 = vadd.f32 %v477, %v479
    %v481 = vrot.slane %v480, 4
    %v482 = vadd.f32 %v480, %v481
    %v483 = vrot.slane %v482, 2
    %v484 = vadd.f32 %v482, %v483
    %v485 = vrot.slane %v484, 1
    %v486 = vadd.f32 %v484, %v485
    %v487 = vmul.f32 %v464, %v464
    %v488 = vmul.f32 %v465, %v465
    %v489 = vmul.f32 %v466, %v466
    %v490 = vmul.f32 %v467, %v467
    %v491 = vmul.f32 %v468, %v468
    %v492 = vsel %vm178, %v487, 0.0
    %v493 = vsel %vm178, %v488, 0.0
    %v494 = vadd.f32 %v492, %v493
    %v495 = vsel %vm178, %v489, 0.0
    %v496 = vadd.f32 %v494, %v495
    %v497 = vsel %vm178, %v490, 0.0
    %v498 = vadd.f32 %v496, %v497
    %v499 = vsel %vm478, %v491, 0.0
    %v500 = vadd.f32 %v498, %v499
    %v501 = vrot.slane %v500, 4
    %v502 = vadd.f32 %v500, %v501
    %v503 = vrot.slane %v502, 2
    %v504 = vadd.f32 %v502, %v503
    %v505 = vrot.slane %v504, 1
    %v506 = vadd.f32 %v504, %v505
    %v508 = vsel %vm178, %v486, 0
    %510 = vmatprep.subr.mxu0 0.0
    %511 = vmatpush1.msra.mxu0 %v85
    %512 = vmatprep.subr.mxu0 0.0
    %513 = vmatpush1.msra.mxu0 %v86
    %514 = vmatprep.subr.mxu0 0.0
    %515 = vmatpush1.msra.mxu0 %v87
    %516 = vmatprep.subr.mxu0 0.0
    %517 = vmatpush1.msra.mxu0 %v88
    %518 = vmatprep.subr.mxu0 0.0
    %519 = vmatpush1.msra.mxu0 %v89
    %520 = vmatprep.subr.mxu0 0.0
    %521 = vmatpush1.msra.mxu0 %v90
    %522 = vmatprep.subr.mxu0 0.0
    %523 = vmatpush1.msra.mxu0 %v91
    %524 = vmatprep.subr.mxu0 0.0
    %525 = vmatpush1.msra.mxu0 %v92
    %526 = vmatprep.subr.mxu0 0.0
    %527 = vmatpush1.msra.mxu0 0.0
    %528 = vmatprep.subr.mxu0 0.0
    %529 = vmatpush1.msra.mxu0 0.0
    %530 = vmatprep.subr.mxu0 0.0
    %531 = vmatpush1.msra.mxu0 0.0
    %532 = vmatprep.subr.mxu0 0.0
    %533 = vmatpush1.msra.mxu0 0.0
    %534 = vmatprep.subr.mxu0 0.0
    %535 = vmatpush1.msra.mxu0 0.0
    %536 = vmatprep.subr.mxu0 0.0
    %537 = vmatpush1.msra.mxu0 0.0
    %538 = vmatprep.subr.mxu0 0.0
    %539 = vmatpush1.msra.mxu0 0.0
    %540 = vmatprep.subr.mxu0 0.0
    %541 = vmatpush1.msra.mxu0 0.0
    %542 = vmatprep.subr.mxu0 0.0
    %543 = vmatpush1.msra.mxu0 0.0
    %544 = vmatprep.subr.mxu0 0.0
    %545 = vmatpush1.msra.mxu0 0.0
    %546 = vmatprep.subr.mxu0 0.0
    %547 = vmatpush1.msra.mxu0 0.0
    %548 = vmatprep.subr.mxu0 0.0
    %549 = vmatpush1.msra.mxu0 0.0
    %550 = vmatprep.subr.mxu0 0.0
    %551 = vmatpush1.msra.mxu0 0.0
    %552 = vmatprep.subr.mxu0 0.0
    %553 = vmatpush1.msra.mxu0 0.0
    %554 = vmatprep.subr.mxu0 0.0
    %555 = vmatpush1.msra.mxu0 0.0
    %556 = vmatprep.subr.mxu0 0.0
    %557 = vmatpush1.msra.mxu0 0.0
    %558 = vmatprep.subr.mxu0 0.0
    %559 = vmatpush1.msra.mxu0 0.0
    %560 = vmatprep.subr.mxu0 0.0
    %561 = vmatpush1.msra.mxu0 0.0
    %562 = vmatprep.subr.mxu0 0.0
    %563 = vmatpush1.msra.mxu0 0.0
    %564 = vmatprep.subr.mxu0 0.0
    %565 = vmatpush1.msra.mxu0 0.0
    %566 = vmatprep.subr.mxu0 0.0
    %567 = vmatpush1.msra.mxu0 0.0
    %568 = vmatprep.subr.mxu0 0.0
    %569 = vmatpush1.msra.mxu0 0.0
    %570 = vmatprep.subr.mxu0 0.0
    %571 = vmatpush1.msra.mxu0 0.0
    %572 = vmatprep.subr.mxu0 0.0
    %573 = vmatpush1.msra.mxu0 0.0
    %574 = vmatprep.mubr.f32.mxu0 0.0
    %575 = vmatmul.mubr.f32.gmra.mrb[0].mxu0 %v508
    %v576 = vpop.f32.mrb[0].mxu0
    %v577 = vadd.f32 0.0, %v576
    %v578 = vpop.f32.mrb[0].mxu0
    %579 = vdwg.mxu0
    %v580 = vmul.f32 %v577, 0.001953125
    %v582 = vsel %vm178, %v506, 0
    %584 = vmatprep.subr.mxu0 0.0
    %585 = vmatpush1.msra.mxu0 %v85
    %586 = vmatprep.subr.mxu0 0.0
    %587 = vmatpush1.msra.mxu0 %v86
    %588 = vmatprep.subr.mxu0 0.0
    %589 = vmatpush1.msra.mxu0 %v87
    %590 = vmatprep.subr.mxu0 0.0
    %591 = vmatpush1.msra.mxu0 %v88
    %592 = vmatprep.subr.mxu0 0.0
    %593 = vmatpush1.msra.mxu0 %v89
    %594 = vmatprep.subr.mxu0 0.0
    %595 = vmatpush1.msra.mxu0 %v90
    %596 = vmatprep.subr.mxu0 0.0
    %597 = vmatpush1.msra.mxu0 %v91
    %598 = vmatprep.subr.mxu0 0.0
    %599 = vmatpush1.msra.mxu0 %v92
    %600 = vmatprep.subr.mxu0 0.0
    %601 = vmatpush1.msra.mxu0 0.0
    %602 = vmatprep.subr.mxu0 0.0
    %603 = vmatpush1.msra.mxu0 0.0
    %604 = vmatprep.subr.mxu0 0.0
    %605 = vmatpush1.msra.mxu0 0.0
    %606 = vmatprep.subr.mxu0 0.0
    %607 = vmatpush1.msra.mxu0 0.0
    %608 = vmatprep.subr.mxu0 0.0
    %609 = vmatpush1.msra.mxu0 0.0
    %610 = vmatprep.subr.mxu0 0.0
    %611 = vmatpush1.msra.mxu0 0.0
    %612 = vmatprep.subr.mxu0 0.0
    %613 = vmatpush1.msra.mxu0 0.0
    %614 = vmatprep.subr.mxu0 0.0
    %615 = vmatpush1.msra.mxu0 0.0
    %616 = vmatprep.subr.mxu0 0.0
    %617 = vmatpush1.msra.mxu0 0.0
    %618 = vmatprep.subr.mxu0 0.0
    %619 = vmatpush1.msra.mxu0 0.0
    %620 = vmatprep.subr.mxu0 0.0
    %621 = vmatpush1.msra.mxu0 0.0
    %622 = vmatprep.subr.mxu0 0.0
    %623 = vmatpush1.msra.mxu0 0.0
    %624 = vmatprep.subr.mxu0 0.0
    %625 = vmatpush1.msra.mxu0 0.0
    %626 = vmatprep.subr.mxu0 0.0
    %627 = vmatpush1.msra.mxu0 0.0
    %628 = vmatprep.subr.mxu0 0.0
    %629 = vmatpush1.msra.mxu0 0.0
    %630 = vmatprep.subr.mxu0 0.0
    %631 = vmatpush1.msra.mxu0 0.0
    %632 = vmatprep.subr.mxu0 0.0
    %633 = vmatpush1.msra.mxu0 0.0
    %634 = vmatprep.subr.mxu0 0.0
    %635 = vmatpush1.msra.mxu0 0.0
    %636 = vmatprep.subr.mxu0 0.0
    %637 = vmatpush1.msra.mxu0 0.0
    %638 = vmatprep.subr.mxu0 0.0
    %639 = vmatpush1.msra.mxu0 0.0
    %640 = vmatprep.subr.mxu0 0.0
    %641 = vmatpush1.msra.mxu0 0.0
    %642 = vmatprep.subr.mxu0 0.0
    %643 = vmatpush1.msra.mxu0 0.0
    %644 = vmatprep.subr.mxu0 0.0
    %645 = vmatpush1.msra.mxu0 0.0
    %646 = vmatprep.subr.mxu0 0.0
    %647 = vmatpush1.msra.mxu0 0.0
    %648 = vmatprep.mubr.f32.mxu0 0.0
    %649 = vmatmul.mubr.f32.gmra.mrb[0].mxu0 %v582
    %v650 = vpop.f32.mrb[0].mxu0
    %v651 = vadd.f32 0.0, %v650
    %v652 = vpop.f32.mrb[0].mxu0
    %653 = vdwg.mxu0
    %v654 = vmul.f32 %v651, 0.001953125
    %v655 = vmul.f32 %v580, %v580
    %v656 = vsub.f32 %v654, %v655
    %v657 = vadd.f32 %v656, 1e-05
    %v658 = vrsqrt.pop %v657
    %v659 = vmul.f32 %v469, %v658
    %v660 = vmul.f32 %v580, %v659
    %v661 = vsub.f32 %v470, %v660
    %v663 = vlaneseq
    %v664 = vshrl.u32 %v663, 7
    %v665 = vsub.s32 0, %v664
    %v666 = vrot.slane %v659, %v665
    %v668 = vmul.f32 %v434, %v666
    %v669 = vmul.f32 %v435, %v666
    %v670 = vmul.f32 %v436, %v666
    %v671 = vmul.f32 %v437, %v666
    %v672 = vmul.f32 %v438, %v666
    %v674 = vlaneseq
    %v675 = vshrl.u32 %v674, 7
    %v676 = vsub.s32 0, %v675
    %v677 = vrot.slane %v661, %v676
    %v679 = vadd.f32 %v668, %v677
    %v680 = vadd.f32 %v669, %v677
    %v681 = vadd.f32 %v670, %v677
    %v682 = vadd.f32 %v671, %v677
    %v683 = vadd.f32 %v672, %v677
    %v684 = vmax.f32 %v679, 0.0
    %v685 = vmax.f32 %v680, 0.0
    %v686 = vmax.f32 %v681, 0.0
    %v687 = vmax.f32 %v682, 0.0
    %v688 = vmax.f32 %v683, 0.0
    %v689 = vmul.f32 %v684, %v442
    %v690 = vmul.f32 %v685, %v447
    %v691 = vmul.f32 %v686, %v452
    %v692 = vmul.f32 %v687, %v457
    %v693 = vmul.f32 %v688, %v462
    %v699 = vrot.slane %v689, 7
    %v700 = vrot.slane %v690, 7
    %v701 = vsel %vm98, %v699, %v700
    %v702 = vrot.slane %v691, 7
    %v703 = vsel %vm98, %v700, %v702
    %v704 = vrot.slane %v692, 7
    %v705 = vsel %vm98, %v702, %v704
    %v706 = vrot.slane %v693, 7
    %v707 = vsel %vm98, %v704, %v706
    %v713 = vsel %vm98, 0.0, %v699
    %v714 = vrot.slane %v689, 1
    %v715 = vrot.slane %v690, 1
    %v716 = vsel %vm114, %v714, %v715
    %v717 = vrot.slane %v691, 1
    %v718 = vsel %vm114, %v715, %v717
    %v719 = vrot.slane %v692, 1
    %v720 = vsel %vm114, %v717, %v719
    %v721 = vrot.slane %v693, 1
    %v722 = vsel %vm114, %v719, %v721
    %v728 = vsel %vm129, %v721, 0.0
    %v729 = vpack.c.bf16 %v701, %v713
    %v730 = vpack.c.bf16 %v705, %v703
    %v731 = vpack.c.bf16 %v707, %v707
    %v732 = vld [vmem:[#allocation5] sm:$0xf]
    %v733 = vld [vmem:[#allocation5 + $0x4] sm:$0xf]
    %v734 = vld [vmem:[#allocation5 + $0x8] sm:$0xf]
    %v735 = vld [vmem:[#allocation5 + $0xc] sm:$0xf]
    %v736 = vld [vmem:[#allocation5 + $0x10] sm:$0xf]
    %v737 = vld [vmem:[#allocation5 + $0x14] sm:$0xf]
    %v738 = vld [vmem:[#allocation5 + $0x18] sm:$0xf]
    %v739 = vld [vmem:[#allocation5 + $0x1c] sm:$0xf]
    %v740 = vpack.c.bf16 %v690, %v689
    %v741 = vpack.c.bf16 %v692, %v691
    %v742 = vpack.c.bf16 %v693, %v693
    %s743 = scalar_lea.vmem [#allocation5], 32
    %v744 = vld [vmem:[%s743] sm:$0xf]
    %v745 = vld [vmem:[%s743 + $0x4] sm:$0xf]
    %v746 = vld [vmem:[%s743 + $0x8] sm:$0xf]
    %v747 = vld [vmem:[%s743 + $0xc] sm:$0xf]
    %v748 = vld [vmem:[%s743 + $0x10] sm:$0xf]
    %v749 = vld [vmem:[%s743 + $0x14] sm:$0xf]
    %v750 = vld [vmem:[%s743 + $0x18] sm:$0xf]
    %v751 = vld [vmem:[%s743 + $0x1c] sm:$0xf]
    %v760 = vunpack.c.l.b16 %v744
    %v761 = vunpack.c.l.b16 %v745
    %v762 = vunpack.c.l.b16 %v746
    %v763 = vunpack.c.l.b16 %v747
    %v764 = vunpack.c.l.b16 %v748
    %v765 = vunpack.c.l.b16 %v749
    %v766 = vunpack.c.l.b16 %v750
    %v767 = vunpack.c.l.b16 %v751
    %v768 = vpack.c.b16 %v761, %v760
    %v769 = vpack.c.b16 %v763, %v762
    %v770 = vpack.c.b16 %v765, %v764
    %v771 = vpack.c.b16 %v767, %v766
    %v777 = vsel %vm178, %v740, 0
    %v780 = vsel %vm178, %v741, 0
    %v783 = vsel %vm178, %v742, 0
    %785 = vmatprep.subr.bf16.mxu0 0
    %786 = vmatpush1.bf16.msra.mxu0 %v768
    %787 = vmatprep.subr.bf16.mxu0 0
    %788 = vmatpush1.bf16.msra.mxu0 %v769
    %789 = vmatprep.subr.bf16.mxu0 0
    %790 = vmatpush1.bf16.msra.mxu0 %v770
    %791 = vmatprep.subr.bf16.mxu0 0
    %792 = vmatpush1.bf16.msra.mxu0 %v771
    %793 = vmatprep.subr.bf16.mxu0 0
    %794 = vmatpush1.bf16.msra.mxu0 0
    %795 = vmatprep.subr.bf16.mxu0 0
    %796 = vmatpush1.bf16.msra.mxu0 0
    %797 = vmatprep.subr.bf16.mxu0 0
    %798 = vmatpush1.bf16.msra.mxu0 0
    %799 = vmatprep.subr.bf16.mxu0 0
    %800 = vmatpush1.bf16.msra.mxu0 0
    %801 = vmatprep.subr.bf16.mxu0 0
    %802 = vmatpush1.bf16.msra.mxu0 0
    %803 = vmatprep.subr.bf16.mxu0 0
    %804 = vmatpush1.bf16.msra.mxu0 0
    %805 = vmatprep.subr.bf16.mxu0 0
    %806 = vmatpush1.bf16.msra.mxu0 0
    %807 = vmatprep.subr.bf16.mxu0 0
    %808 = vmatpush1.bf16.msra.mxu0 0
    %809 = vmatprep.subr.bf16.mxu0 0
    %810 = vmatpush1.bf16.msra.mxu0 0
    %811 = vmatprep.subr.bf16.mxu0 0
    %812 = vmatpush1.bf16.msra.mxu0 0
    %813 = vmatprep.subr.bf16.mxu0 0
    %814 = vmatpush1.bf16.msra.mxu0 0
    %815 = vmatprep.subr.bf16.mxu0 0
    %816 = vmatpush1.bf16.msra.mxu0 0
    %817 = vmatprep.mubr.bf16.mxu0 0
    %818 = vmatmul.mubr.bf16.gmra.mrb[0].mxu0 %v777
    %v819 = vpop.f32.mrb[0].mxu0
    %v820 = vadd.f32 0.0, %v819
    %v821 = vpop.f32.mrb[0].mxu0
    %v822 = vpop.f32.mrb[0].mxu0
    %v823 = vadd.f32 0.0, %v822
    %v824 = vpop.f32.mrb[0].mxu0
    %825 = vmatprep.mubr.bf16.mxu0 0
    %826 = vmatmul.mubr.bf16.gmra.mrb[0].mxu0 %v780
    %v827 = vpop.f32.mrb[0].mxu0
    %v828 = vadd.f32 0.0, %v827
    %v829 = vpop.f32.mrb[0].mxu0
    %v830 = vpop.f32.mrb[0].mxu0
    %v831 = vadd.f32 0.0, %v830
    %v832 = vpop.f32.mrb[0].mxu0
    %833 = vmatprep.mubr.bf16.mxu0 0
    %834 = vmatmul.mubr.bf16.gmra.mrb[0].mxu0 %v783
    %v835 = vpop.f32.mrb[0].mxu0
    %v836 = vadd.f32 0.0, %v835
    %v837 = vpop.f32.mrb[0].mxu0
    %v838 = vpop.f32.mrb[0].mxu0
    %v839 = vpop.f32.mrb[0].mxu0
    %840 = vdwg.mxu0
    %v849 = vunpack.c.l.b16 %v732
    %v850 = vunpack.c.l.b16 %v733
    %v851 = vunpack.c.l.b16 %v734
    %v852 = vunpack.c.l.b16 %v735
    %v853 = vunpack.c.l.b16 %v736
    %v854 = vunpack.c.l.b16 %v737
    %v855 = vunpack.c.l.b16 %v738
    %v856 = vunpack.c.l.b16 %v739
    %v857 = vpack.c.b16 %v850, %v849
    %v858 = vpack.c.b16 %v852, %v851
    %v859 = vpack.c.b16 %v854, %v853
    %v860 = vpack.c.b16 %v856, %v855
    %v866 = vsel %vm178, %v729, 0
    %v869 = vsel %vm178, %v730, 0
    %v872 = vsel %vm178, %v731, 0
    %874 = vmatprep.subr.bf16.mxu0 0
    %875 = vmatpush1.bf16.msra.mxu0 %v857
    %876 = vmatprep.subr.bf16.mxu0 0
    %877 = vmatpush1.bf16.msra.mxu0 %v858
    %878 = vmatprep.subr.bf16.mxu0 0
    %879 = vmatpush1.bf16.msra.mxu0 %v859
    %880 = vmatprep.subr.bf16.mxu0 0
    %881 = vmatpush1.bf16.msra.mxu0 %v860
    %882 = vmatprep.subr.bf16.mxu0 0
    %883 = vmatpush1.bf16.msra.mxu0 0
    %884 = vmatprep.subr.bf16.mxu0 0
    %885 = vmatpush1.bf16.msra.mxu0 0
    %886 = vmatprep.subr.bf16.mxu0 0
    %887 = vmatpush1.bf16.msra.mxu0 0
    %888 = vmatprep.subr.bf16.mxu0 0
    %889 = vmatpush1.bf16.msra.mxu0 0
    %890 = vmatprep.subr.bf16.mxu0 0
    %891 = vmatpush1.bf16.msra.mxu0 0
    %892 = vmatprep.subr.bf16.mxu0 0
    %893 = vmatpush1.bf16.msra.mxu0 0
    %894 = vmatprep.subr.bf16.mxu0 0
    %895 = vmatpush1.bf16.msra.mxu0 0
    %896 = vmatprep.subr.bf16.mxu0 0
    %897 = vmatpush1.bf16.msra.mxu0 0
    %898 = vmatprep.subr.bf16.mxu0 0
    %899 = vmatpush1.bf16.msra.mxu0 0
    %900 = vmatprep.subr.bf16.mxu0 0
    %901 = vmatpush1.bf16.msra.mxu0 0
    %902 = vmatprep.subr.bf16.mxu0 0
    %903 = vmatpush1.bf16.msra.mxu0 0
    %904 = vmatprep.subr.bf16.mxu0 0
    %905 = vmatpush1.bf16.msra.mxu0 0
    %906 = vmatprep.mubr.bf16.mxu0 0
    %907 = vmatmul.mubr.bf16.gmra.mrb[0].mxu0 %v866
    %v908 = vpop.f32.mrb[0].mxu0
    %v909 = vadd.f32 %v820, %v908
    %v910 = vpop.f32.mrb[0].mxu0
    %v911 = vpop.f32.mrb[0].mxu0
    %v912 = vadd.f32 %v823, %v911
    %v913 = vpop.f32.mrb[0].mxu0
    %914 = vmatprep.mubr.bf16.mxu0 0
    %915 = vmatmul.mubr.bf16.gmra.mrb[0].mxu0 %v869
    %v916 = vpop.f32.mrb[0].mxu0
    %v917 = vadd.f32 %v828, %v916
    %v918 = vpop.f32.mrb[0].mxu0
    %v919 = vpop.f32.mrb[0].mxu0
    %v920 = vadd.f32 %v831, %v919
    %v921 = vpop.f32.mrb[0].mxu0
    %922 = vmatprep.mubr.bf16.mxu0 0
    %923 = vmatmul.mubr.bf16.gmra.mrb[0].mxu0 %v872
    %v924 = vpop.f32.mrb[0].mxu0
    %v925 = vadd.f32 %v836, %v924
    %v926 = vpop.f32.mrb[0].mxu0
    %v927 = vpop.f32.mrb[0].mxu0
    %v928 = vpop.f32.mrb[0].mxu0
    %929 = vdwg.mxu0
    %v930 = vpack.c.bf16 %v718, %v716
    %v931 = vpack.c.bf16 %v722, %v720
    %v932 = vpack.c.bf16 %v728, %v728
    %s933 = scalar_lea.vmem [#allocation5], 64
    %v934 = vld [vmem:[%s933] sm:$0xf]
    %v935 = vld [vmem:[%s933 + $0x4] sm:$0xf]
    %v936 = vld [vmem:[%s933 + $0x8] sm:$0xf]
    %v937 = vld [vmem:[%s933 + $0xc] sm:$0xf]
    %v938 = vld [vmem:[%s933 + $0x10] sm:$0xf]
    %v939 = vld [vmem:[%s933 + $0x14] sm:$0xf]
    %v940 = vld [vmem:[%s933 + $0x18] sm:$0xf]
    %v941 = vld [vmem:[%s933 + $0x1c] sm:$0xf]
    %v950 = vunpack.c.l.b16 %v934
    %v951 = vunpack.c.l.b16 %v935
    %v952 = vunpack.c.l.b16 %v936
    %v953 = vunpack.c.l.b16 %v937
    %v954 = vunpack.c.l.b16 %v938
    %v955 = vunpack.c.l.b16 %v939
    %v956 = vunpack.c.l.b16 %v940
    %v957 = vunpack.c.l.b16 %v941
    %v958 = vpack.c.b16 %v951, %v950
    %v959 = vpack.c.b16 %v953, %v952
    %v960 = vpack.c.b16 %v955, %v954
    %v961 = vpack.c.b16 %v957, %v956
    %v967 = vsel %vm178, %v930, 0
    %v970 = vsel %vm178, %v931, 0
    %v973 = vsel %vm178, %v932, 0
    %975 = vmatprep.subr.bf16.mxu0 0
    %976 = vmatpush1.bf16.msra.mxu0 %v958
    %977 = vmatprep.subr.bf16.mxu0 0
    %978 = vmatpush1.bf16.msra.mxu0 %v959
    %979 = vmatprep.subr.bf16.mxu0 0
    %980 = vmatpush1.bf16.msra.mxu0 %v960
    %981 = vmatprep.subr.bf16.mxu0 0
    %982 = vmatpush1.bf16.msra.mxu0 %v961
    %983 = vmatprep.subr.bf16.mxu0 0
    %984 = vmatpush1.bf16.msra.mxu0 0
    %985 = vmatprep.subr.bf16.mxu0 0
    %986 = vmatpush1.bf16.msra.mxu0 0
    %987 = vmatprep.subr.bf16.mxu0 0
    %988 = vmatpush1.bf16.msra.mxu0 0
    %989 = vmatprep.subr.bf16.mxu0 0
    %990 = vmatpush1.bf16.msra.mxu0 0
    %991 = vmatprep.subr.bf16.mxu0 0
    %992 = vmatpush1.bf16.msra.mxu0 0
    %993 = vmatprep.subr.bf16.mxu0 0
    %994 = vmatpush1.bf16.msra.mxu0 0
    %995 = vmatprep.subr.bf16.mxu0 0
    %996 = vmatpush1.bf16.msra.mxu0 0
    %997 = vmatprep.subr.bf16.mxu0 0
    %998 = vmatpush1.bf16.msra.mxu0 0
    %999 = vmatprep.subr.bf16.mxu0 0
    %1000 = vmatpush1.bf16.msra.mxu0 0
    %1001 = vmatprep.subr.bf16.mxu0 0
    %1002 = vmatpush1.bf16.msra.mxu0 0
    %1003 = vmatprep.subr.bf16.mxu0 0
    %1004 = vmatpush1.bf16.msra.mxu0 0
    %1005 = vmatprep.subr.bf16.mxu0 0
    %1006 = vmatpush1.bf16.msra.mxu0 0
    %1007 = vmatprep.mubr.bf16.mxu0 0
    %1008 = vmatmul.mubr.bf16.gmra.mrb[0].mxu0 %v967
    %v1009 = vpop.f32.mrb[0].mxu0
    %v1010 = vadd.f32 0.0, %v1009
    %v1011 = vpop.f32.mrb[0].mxu0
    %v1012 = vpop.f32.mrb[0].mxu0
    %v1013 = vadd.f32 0.0, %v1012
    %v1014 = vpop.f32.mrb[0].mxu0
    %1015 = vmatprep.mubr.bf16.mxu0 0
    %1016 = vmatmul.mubr.bf16.gmra.mrb[0].mxu0 %v970
    %v1017 = vpop.f32.mrb[0].mxu0
    %v1018 = vadd.f32 0.0, %v1017
    %v1019 = vpop.f32.mrb[0].mxu0
    %v1020 = vpop.f32.mrb[0].mxu0
    %v1021 = vadd.f32 0.0, %v1020
    %v1022 = vpop.f32.mrb[0].mxu0
    %1023 = vmatprep.mubr.bf16.mxu0 0
    %1024 = vmatmul.mubr.bf16.gmra.mrb[0].mxu0 %v973
    %v1025 = vpop.f32.mrb[0].mxu0
    %v1026 = vadd.f32 0.0, %v1025
    %v1027 = vpop.f32.mrb[0].mxu0
    %v1028 = vpop.f32.mrb[0].mxu0
    %v1029 = vpop.f32.mrb[0].mxu0
    %1030 = vdwg.mxu0
    %v1031 = vadd.f32 %v909, %v1010
    %v1032 = vadd.f32 %v912, %v1013
    %v1033 = vadd.f32 %v917, %v1018
    %v1034 = vadd.f32 %v920, %v1021
    %v1035 = vadd.f32 %v925, %v1026
    %v1036 = vmul.f32 %v1031, %v442
    %v1037 = vmul.f32 %v1032, %v447
    %v1038 = vmul.f32 %v1033, %v452
    %v1039 = vmul.f32 %v1034, %v457
    %v1040 = vmul.f32 %v1035, %v462
    %v1041 = vld [vmem:[%s7] sm:$0x1]
    %v1042 = vld [vmem:[%s8] sm:$0x1]
    %v1043 = vsel %vm178, %v1036, 0.0
    %v1044 = vsel %vm178, %v1037, 0.0
    %v1045 = vadd.f32 %v1043, %v1044
    %v1046 = vsel %vm178, %v1038, 0.0
    %v1047 = vadd.f32 %v1045, %v1046
    %v1048 = vsel %vm178, %v1039, 0.0
    %v1049 = vadd.f32 %v1047, %v1048
    %v1050 = vsel %vm478, %v1040, 0.0
    %v1051 = vadd.f32 %v1049, %v1050
    %v1052 = vrot.slane %v1051, 4
    %v1053 = vadd.f32 %v1051, %v1052
    %v1054 = vrot.slane %v1053, 2
    %v1055 = vadd.f32 %v1053, %v1054
    %v1056 = vrot.slane %v1055, 1
    %v1057 = vadd.f32 %v1055, %v1056
    %v1058 = vmul.f32 %v1036, %v1036
    %v1059 = vmul.f32 %v1037, %v1037
    %v1060 = vmul.f32 %v1038, %v1038
    %v1061 = vmul.f32 %v1039, %v1039
    %v1062 = vmul.f32 %v1040, %v1040
    %v1063 = vsel %vm178, %v1058, 0.0
    %v1064 = vsel %vm178, %v1059, 0.0
    %v1065 = vadd.f32 %v1063, %v1064
    %v1066 = vsel %vm178, %v1060, 0.0
    %v1067 = vadd.f32 %v1065, %v1066
    %v1068 = vsel %vm178, %v1061, 0.0
    %v1069 = vadd.f32 %v1067, %v1068
    %v1070 = vsel %vm478, %v1062, 0.0
    %v1071 = vadd.f32 %v1069, %v1070
    %v1072 = vrot.slane %v1071, 4
    %v1073 = vadd.f32 %v1071, %v1072
    %v1074 = vrot.slane %v1073, 2
    %v1075 = vadd.f32 %v1073, %v1074
    %v1076 = vrot.slane %v1075, 1
    %v1077 = vadd.f32 %v1075, %v1076
    %v1079 = vsel %vm178, %v1057, 0
    %1081 = vmatprep.subr.mxu0 0.0
    %1082 = vmatpush1.msra.mxu0 %v85
    %1083 = vmatprep.subr.mxu0 0.0
    %1084 = vmatpush1.msra.mxu0 %v86
    %1085 = vmatprep.subr.mxu0 0.0
    %1086 = vmatpush1.msra.mxu0 %v87
    %1087 = vmatprep.subr.mxu0 0.0
    %1088 = vmatpush1.msra.mxu0 %v88
    %1089 = vmatprep.subr.mxu0 0.0
    %1090 = vmatpush1.msra.mxu0 %v89
    %1091 = vmatprep.subr.mxu0 0.0
    %1092 = vmatpush1.msra.mxu0 %v90
    %1093 = vmatprep.subr.mxu0 0.0
    %1094 = vmatpush1.msra.mxu0 %v91
    %1095 = vmatprep.subr.mxu0 0.0
    %1096 = vmatpush1.msra.mxu0 %v92
    %1097 = vmatprep.subr.mxu0 0.0
    %1098 = vmatpush1.msra.mxu0 0.0
    %1099 = vmatprep.subr.mxu0 0.0
    %1100 = vmatpush1.msra.mxu0 0.0
    %1101 = vmatprep.subr.mxu0 0.0
    %1102 = vmatpush1.msra.mxu0 0.0
    %1103 = vmatprep.subr.mxu0 0.0
    %1104 = vmatpush1.msra.mxu0 0.0
    %1105 = vmatprep.subr.mxu0 0.0
    %1106 = vmatpush1.msra.mxu0 0.0
    %1107 = vmatprep.subr.mxu0 0.0
    %1108 = vmatpush1.msra.mxu0 0.0
    %1109 = vmatprep.subr.mxu0 0.0
    %1110 = vmatpush1.msra.mxu0 0.0
    %1111 = vmatprep.subr.mxu0 0.0
    %1112 = vmatpush1.msra.mxu0 0.0
    %1113 = vmatprep.subr.mxu0 0.0
    %1114 = vmatpush1.msra.mxu0 0.0
    %1115 = vmatprep.subr.mxu0 0.0
    %1116 = vmatpush1.msra.mxu0 0.0
    %1117 = vmatprep.subr.mxu0 0.0
    %1118 = vmatpush1.msra.mxu0 0.0
    %1119 = vmatprep.subr.mxu0 0.0
    %1120 = vmatpush1.msra.mxu0 0.0
    %1121 = vmatprep.subr.mxu0 0.0
    %1122 = vmatpush1.msra.mxu0 0.0
    %1123 = vmatprep.subr.mxu0 0.0
    %1124 = vmatpush1.msra.mxu0 0.0
    %1125 = vmatprep.subr.mxu0 0.0
    %1126 = vmatpush1.msra.mxu0 0.0
    %1127 = vmatprep.subr.mxu0 0.0
    %1128 = vmatpush1.msra.mxu0 0.0
    %1129 = vmatprep.subr.mxu0 0.0
    %1130 = vmatpush1.msra.mxu0 0.0
    %1131 = vmatprep.subr.mxu0 0.0
    %1132 = vmatpush1.msra.mxu0 0.0
    %1133 = vmatprep.subr.mxu0 0.0
    %1134 = vmatpush1.msra.mxu0 0.0
    %1135 = vmatprep.subr.mxu0 0.0
    %1136 = vmatpush1.msra.mxu0 0.0
    %1137 = vmatprep.subr.mxu0 0.0
    %1138 = vmatpush1.msra.mxu0 0.0
    %1139 = vmatprep.subr.mxu0 0.0
    %1140 = vmatpush1.msra.mxu0 0.0
    %1141 = vmatprep.subr.mxu0 0.0
    %1142 = vmatpush1.msra.mxu0 0.0
    %1143 = vmatprep.subr.mxu0 0.0
    %1144 = vmatpush1.msra.mxu0 0.0
    %1145 = vmatprep.mubr.f32.mxu0 0.0
    %1146 = vmatmul.mubr.f32.gmra.mrb[0].mxu0 %v1079
    %v1147 = vpop.f32.mrb[0].mxu0
    %v1148 = vadd.f32 0.0, %v1147
    %v1149 = vpop.f32.mrb[0].mxu0
    %1150 = vdwg.mxu0
    %v1151 = vmul.f32 %v1148, 0.001953125
    %v1153 = vsel %vm178, %v1077, 0
    %1155 = vmatprep.subr.mxu0 0.0
    %1156 = vmatpush1.msra.mxu0 %v85
    %1157 = vmatprep.subr.mxu0 0.0
    %1158 = vmatpush1.msra.mxu0 %v86
    %1159 = vmatprep.subr.mxu0 0.0
    %1160 = vmatpush1.msra.mxu0 %v87
    %1161 = vmatprep.subr.mxu0 0.0
    %1162 = vmatpush1.msra.mxu0 %v88
    %1163 = vmatprep.subr.mxu0 0.0
    %1164 = vmatpush1.msra.mxu0 %v89
    %1165 = vmatprep.subr.mxu0 0.0
    %1166 = vmatpush1.msra.mxu0 %v90
    %1167 = vmatprep.subr.mxu0 0.0
    %1168 = vmatpush1.msra.mxu0 %v91
    %1169 = vmatprep.subr.mxu0 0.0
    %1170 = vmatpush1.msra.mxu0 %v92
    %1171 = vmatprep.subr.mxu0 0.0
    %1172 = vmatpush1.msra.mxu0 0.0
    %1173 = vmatprep.subr.mxu0 0.0
    %1174 = vmatpush1.msra.mxu0 0.0
    %1175 = vmatprep.subr.mxu0 0.0
    %1176 = vmatpush1.msra.mxu0 0.0
    %1177 = vmatprep.subr.mxu0 0.0
    %1178 = vmatpush1.msra.mxu0 0.0
    %1179 = vmatprep.subr.mxu0 0.0
    %1180 = vmatpush1.msra.mxu0 0.0
    %1181 = vmatprep.subr.mxu0 0.0
    %1182 = vmatpush1.msra.mxu0 0.0
    %1183 = vmatprep.subr.mxu0 0.0
    %1184 = vmatpush1.msra.mxu0 0.0
    %1185 = vmatprep.subr.mxu0 0.0
    %1186 = vmatpush1.msra.mxu0 0.0
    %1187 = vmatprep.subr.mxu0 0.0
    %1188 = vmatpush1.msra.mxu0 0.0
    %1189 = vmatprep.subr.mxu0 0.0
    %1190 = vmatpush1.msra.mxu0 0.0
    %1191 = vmatprep.subr.mxu0 0.0
    %1192 = vmatpush1.msra.mxu0 0.0
    %1193 = vmatprep.subr.mxu0 0.0
    %1194 = vmatpush1.msra.mxu0 0.0
    %1195 = vmatprep.subr.mxu0 0.0
    %1196 = vmatpush1.msra.mxu0 0.0
    %1197 = vmatprep.subr.mxu0 0.0
    %1198 = vmatpush1.msra.mxu0 0.0
    %1199 = vmatprep.subr.mxu0 0.0
    %1200 = vmatpush1.msra.mxu0 0.0
    %1201 = vmatprep.subr.mxu0 0.0
    %1202 = vmatpush1.msra.mxu0 0.0
    %1203 = vmatprep.subr.mxu0 0.0
    %1204 = vmatpush1.msra.mxu0 0.0
    %1205 = vmatprep.subr.mxu0 0.0
    %1206 = vmatpush1.msra.mxu0 0.0
    %1207 = vmatprep.subr.mxu0 0.0
    %1208 = vmatpush1.msra.mxu0 0.0
    %1209 = vmatprep.subr.mxu0 0.0
    %1210 = vmatpush1.msra.mxu0 0.0
    %1211 = vmatprep.subr.mxu0 0.0
    %1212 = vmatpush1.msra.mxu0 0.0
    %1213 = vmatprep.subr.mxu0 0.0
    %1214 = vmatpush1.msra.mxu0 0.0
    %1215 = vmatprep.subr.mxu0 0.0
    %1216 = vmatpush1.msra.mxu0 0.0
    %1217 = vmatprep.subr.mxu0 0.0
    %1218 = vmatpush1.msra.mxu0 0.0
    %1219 = vmatprep.mubr.f32.mxu0 0.0
    %1220 = vmatmul.mubr.f32.gmra.mrb[0].mxu0 %v1153
    %v1221 = vpop.f32.mrb[0].mxu0
    %v1222 = vadd.f32 0.0, %v1221
    %v1223 = vpop.f32.mrb[0].mxu0
    %1224 = vdwg.mxu0
    %v1225 = vmul.f32 %v1222, 0.001953125
    %v1226 = vmul.f32 %v1151, %v1151
    %v1227 = vsub.f32 %v1225, %v1226
    %v1228 = vadd.f32 %v1227, 1e-05
    %v1229 = vrsqrt.pop %v1228
    %v1230 = vmul.f32 %v1041, %v1229
    %v1231 = vmul.f32 %v1151, %v1230
    %v1232 = vsub.f32 %v1042, %v1231
    %v1234 = vlaneseq
    %v1235 = vshrl.u32 %v1234, 7
    %v1236 = vsub.s32 0, %v1235
    %v1237 = vrot.slane %v1230, %v1236
    %v1239 = vmul.f32 %v1031, %v1237
    %v1240 = vmul.f32 %v1032, %v1237
    %v1241 = vmul.f32 %v1033, %v1237
    %v1242 = vmul.f32 %v1034, %v1237
    %v1243 = vmul.f32 %v1035, %v1237
    %v1245 = vlaneseq
    %v1246 = vshrl.u32 %v1245, 7
    %v1247 = vsub.s32 0, %v1246
    %v1248 = vrot.slane %v1232, %v1247
    %v1250 = vadd.f32 %v1239, %v1248
    %v1251 = vadd.f32 %v1240, %v1248
    %v1252 = vadd.f32 %v1241, %v1248
    %v1253 = vadd.f32 %v1242, %v1248
    %v1254 = vadd.f32 %v1243, %v1248
    %v1255 = vadd.f32 %v1250, %v75
    %v1256 = vadd.f32 %v1251, %v76
    %v1257 = vadd.f32 %v1252, %v77
    %v1258 = vadd.f32 %v1253, %v78
    %v1259 = vadd.f32 %v1254, %v79
    %v1260 = vmax.f32 %v1255, 0.0
    %v1261 = vmax.f32 %v1256, 0.0
    %v1262 = vmax.f32 %v1257, 0.0
    %v1263 = vmax.f32 %v1258, 0.0
    %v1264 = vmax.f32 %v1259, 0.0
    %1265 = vst.msk [vmem:[#allocation8] sm:$0xff] %vm178, %v1260
    %1266 = vst.msk [vmem:[#allocation8 + $0x8] sm:$0xff] %vm178, %v1261
    %1267 = vst.msk [vmem:[#allocation8 + $0x10] sm:$0xff] %vm178, %v1262
    %1268 = vst.msk [vmem:[#allocation8 + $0x18] sm:$0xff] %vm178, %v1263
    %1269 = vst.msk [vmem:[#allocation8 + $0x20] sm:$0xf] %vm478, %v1264
    // Predicated region
    $region50: #{tpu_custom_call.1} parent=1 // pred_check
      _
    $region51: #{tpu_custom_call.1} parent=1 // pred_check_branch
      %1271 = sbr.rel (0) target = $region53
    $region52: #{tpu_custom_call.1} parent=1 // pred_region
      %s1273 = ssub.s32 640, 640
      %1274 = vsyncadd [#allocation4], %s1273
      %s1275 = sshll.u32 [#allocation8], 4
      %s1276 = int_to_ptr.vmem [resolvable:$true] %s1275
      %1281 = dma.vmem_to_hbm [thread:$0]  %s1276, 640, %s9, [#allocation4], 128, 128, 8
    $region53: #{tpu_custom_call.1} parent=1 // pred_fallthru
      _
    // Predicated region
    $region54: #{tpu_custom_call.1} parent=1 // pred_check
      _
    $region55: #{tpu_custom_call.1} parent=1 // pred_check_branch
      %1283 = sbr.rel (0) target = $region57
    $region56: #{tpu_custom_call.1} parent=1 // pred_region
      %1284 = dma.done [#allocation4], 640
    $region57: #{tpu_custom_call.1} parent=1 // pred_fallthru
      _
    %1285 = vsyncpa [#allocation3], 1
    %1286 = vsyncpa [#allocation6], 1
    %1287 = vsyncpa [#allocation4], 1

</llo_original>
